<compile_context>
chip_gen: v5e
topology: v5e:2x2
jax: 0.10.0
libtpu: 0.0.40
codegen_flags: <defaults>
</compile_context>

<pallas_src>
import functools

import jax
import jax.numpy as jnp
from jax import lax
from jax.experimental import pallas as pl
from jax.experimental.pallas import tpu as pltpu


def _calibrate_roll_shifts(H):
    """One-time probe of pltpu.roll's rotation direction so each gate block lands at lane 0.

    Returns static shifts (f_shift, g_shift, o_shift) for a (B, 4H) gate vector laid out [i|f|g|o].
    """
    G = 4 * H

    def probe_kernel(x_ref, o_ref):
        o_ref[...] = pltpu.roll(x_ref[...], shift=H, axis=1)

    lanes = jnp.tile(jnp.arange(G, dtype=jnp.float32), (8, 1))
    out = pl.pallas_call(
        probe_kernel,
        out_shape=jax.ShapeDtypeStruct((8, G), jnp.float32),
        in_specs=[pl.BlockSpec(memory_space=pltpu.MemorySpace.VMEM)],
        out_specs=pl.BlockSpec(memory_space=pltpu.MemorySpace.VMEM),
    )(lanes)
    v = int(out[0, 0])
    if v == 3 * H:      # np.roll convention: out[j] = in[(j - shift) % G]
        return (3 * H, 2 * H, H)
    elif v == H:        # opposite convention: out[j] = in[(j + shift) % G]
        return (H, 2 * H, 3 * H)
    raise RuntimeError(f"unexpected pltpu.roll semantics (probe value {v})")


def make_lstm_kernel(L, B, T, H, roll_shifts):
    """Pallas kernel closure for fixed (static) sizes.  B is the padded batch (multiple of 8).

    Ref order:
      inputs : x(T*B, E), h0(L, B, 4H), c0(L, B, 4H),
               [w_ihT, w_hhT(4H,4H), b(1,4H)] * L   (i/f/o columns pre-scaled by 0.5),
               w_fcT(4H, OP), b_fc(1, OP)           (pre-scaled by 0.5, lane-padded to OP)
      outputs: sig(B, OP), h_n(L,B,4H), c_n(L,B,4H)
      scratch: xproj(T*B,4H), seq(T*B,4H)
    """
    G = 4 * H
    SF, SG, SO = roll_shifts

    def kernel(*refs):
        x_ref, h0_ref, c0_ref = refs[0], refs[1], refs[2]
        idx = 3
        layer_refs = []
        for _ in range(L):
            layer_refs.append((refs[idx], refs[idx + 1], refs[idx + 2]))
            idx += 3
        wfc_ref, bfc_ref = refs[idx], refs[idx + 1]
        idx += 2
        sig_ref, hn_ref, cn_ref = refs[idx], refs[idx + 1], refs[idx + 2]
        xproj_ref, seq_ref = refs[idx + 3], refs[idx + 4]

        # Per-lane post-tanh scale/offset, computed ONCE (broadcast_in_dim is not CSE'd by JAX).
        # i/f/o gate pre-activations arrive already halved (weights pre-scaled), so
        #   sigmoid lanes: 0.5 * tanh(z/2) + 0.5     tanh lane-block (g): tanh(z)
        lane = lax.broadcasted_iota(jnp.int32, (B, G), 1)
        is_g = (lane >= 2 * H) & (lane < 3 * H)
        post_scale = jnp.where(is_g, 1.0, 0.5).astype(jnp.float32)
        post_off = jnp.where(is_g, 0.0, 0.5).astype(jnp.float32)

        def activate(gates):
            # One EUP tanh pass over the full 128-lane vreg + one VALU madd.
            return jnp.tanh(gates) * post_scale + post_off

        h_last = None
        for l in range(L):
            wihT_ref, whhT_ref, b_ref = layer_refs[l]
            in_ref = x_ref if l == 0 else seq_ref

            # Hoisted input-to-hidden projection + bias: one MXU matmul per layer,
            # removed from the latency-critical serial recurrence.
            xproj_ref[...] = (
                jnp.dot(in_ref[...], wihT_ref[...], preferred_element_type=jnp.float32)
                + b_ref[...])

            whhT = whhT_ref[...]          # (4H, 4H); rows [H:4H) are zero -> padded h lanes vanish
            write_seq = (l < L - 1)       # last layer's per-step outputs are never read

            def step(t, carry, *, _whhT=whhT, _write_seq=write_seq):
                h, c = carry              # (B, 4H) each; lanes [H:4H) are don't-care padding
                toff = pl.multiple_of(t * B, B)
                gates = xproj_ref[pl.ds(toff, B), :] + jnp.dot(
                    h, _whhT, preferred_element_type=jnp.float32)      # (B, 4H) = [i|f|g|o]
                act = activate(gates)
                # Align f/g/o to lane 0 on the XLU (no sub-128-lane slices on the critical path).
                f_al = pltpu.roll(act, shift=SF, axis=1)
                g_al = pltpu.roll(act, shift=SG, axis=1)
                o_al = pltpu.roll(act, shift=SO, axis=1)
                c_new = f_al * c + act * g_al          # lanes [0:H) valid
                h_new = o_al * jnp.tanh(c_new)         # lanes [0:H) valid
                if _write_seq:
                    seq_ref[pl.ds(toff, B), :] = h_new
                return (h_new, c_new)

            h_f, c_f = lax.fori_loop(0, T, step, (h0_ref[l], c0_ref[l]), unroll=True)
            hn_ref[l] = h_f
            cn_ref[l] = c_f
            h_last = h_f
            # Inter-layer LSTM dropout (p=0.5) is train-only in PyTorch -> identity at inference.

        # Final dropout(0.3) is train-only -> identity.  fc + sigmoid on the last timestep only:
        # sigmoid_out.view(B, -1)[:, -1] == sigmoid(fc(h_{T-1}))[:, output_size-1].
        # wfc rows [H:4H) are zero (padded h lanes don't contribute) and wfc/bfc are pre-halved,
        # so sigmoid(z) = 0.5 * tanh(z/2) + 0.5 is a single EUP tanh + madd, stored lane-dense.
        logits_half = (jnp.dot(h_last, wfc_ref[...], preferred_element_type=jnp.float32)
                       + bfc_ref[...])
        sig_ref[...] = 0.5 * jnp.tanh(logits_half) + 0.5

    return kernel


def init_params(key, vocab_size, output_size, embedding_dim, hidden_dim, n_layers):
    ks = iter(jax.random.split(key, 3 + 4 * n_layers))
    bound = float(hidden_dim) ** -0.5
    p = {"embedding": jax.random.normal(next(ks), (vocab_size, embedding_dim), jnp.float32) * 0.1,
         "layers": []}
    for l in range(n_layers):
        in_dim = embedding_dim if l == 0 else hidden_dim
        p["layers"].append({
            "w_ih": jax.random.uniform(next(ks), (4 * hidden_dim, in_dim), jnp.float32, -bound, bound),
            "w_hh": jax.random.uniform(next(ks), (4 * hidden_dim, hidden_dim), jnp.float32, -bound, bound),
            "b_ih": jax.random.uniform(next(ks), (4 * hidden_dim,), jnp.float32, -bound, bound),
            "b_hh": jnp.zeros((4 * hidden_dim,), jnp.float32),
        })
    p["fc_w"] = jax.random.uniform(next(ks), (output_size, hidden_dim), jnp.float32, -bound, bound)
    p["fc_b"] = jax.random.uniform(next(ks), (output_size,), jnp.float32, -bound, bound)
    return p


def prepare_kernel_params(params, *, n_layers, hidden_dim, output_size, fc_lane_pad=128):
    """One-time (out of the forward hot path) transpose / bias-sum / gate-pre-scale / zero-pad."""
    H = hidden_dim
    G = 4 * H
    OP = max(fc_lane_pad, output_size)

    # i/f/o gate columns pre-scaled by 0.5 so sigmoid(z) = 0.5*tanh(z/2)+0.5 needs no per-step
    # scaling inside the kernel; g gate columns untouched (plain tanh).
    col_scale = jnp.where(
        (jnp.arange(G) >= 2 * H) & (jnp.arange(G) < 3 * H), 1.0, 0.5).astype(jnp.float32)

    kp = {"embedding": params["embedding"], "layers": [], "fc_lane_pad": OP}
    for l in range(n_layers):
        lp = params["layers"][l]
        wihT = jnp.transpose(lp["w_ih"]) * col_scale[None, :]              # (in_dim, 4H)
        if l > 0:
            # next-layer input is the 4H-lane padded hidden state -> zero rows for padded lanes
            wihT = jnp.pad(wihT, ((0, G - wihT.shape[0]), (0, 0)))
        whhT = jnp.pad(jnp.transpose(lp["w_hh"]) * col_scale[None, :],
                       ((0, G - H), (0, 0)))                               # (4H, 4H)
        b = ((lp["b_ih"] + lp["b_hh"]) * col_scale).reshape(1, G)
        kp["layers"].append({"wihT": wihT, "whhT": whhT, "b": b})

    # FC pre-halved (sigmoid via tanh) and lane-padded to OP for an unmasked lane-dense store.
    fcT = 0.5 * jnp.transpose(params["fc_w"])                              # (H, O)
    kp["fcT"] = jnp.pad(fcT, ((0, G - H), (0, OP - output_size)))          # (4H, OP)
    kp["fcb"] = jnp.pad(0.5 * params["fc_b"].reshape(1, output_size),
                        ((0, 0), (0, OP - output_size)))                   # (1, OP)
    return kp


@functools.partial(jax.jit,
                   static_argnames=("n_layers", "hidden_dim", "output_size", "roll_shifts"))
def sentiment_forward(x_tokens, hidden, kparams, *, n_layers, hidden_dim, output_size, roll_shifts):
    """Matches Sentiment_Classifier.forward in eval mode (dropout = identity)."""
    B, T = x_tokens.shape
    H, L, O = hidden_dim, n_layers, output_size
    G = 4 * H
    B_pad = max(8, -(-B // 8) * 8)                       # sublane-tile padded batch
    OP = kparams["fcT"].shape[1]                         # lane-padded FC output width

    emb = jnp.take(kparams["embedding"], x_tokens, axis=0)        # (B, T, E) embedding gather glue
    E = emb.shape[-1]
    emb = jnp.pad(emb, ((0, B_pad - B), (0, 0), (0, 0)))
    x_tm = jnp.transpose(emb, (1, 0, 2)).reshape(T * B_pad, E)    # time-major, flattened

    h0 = jnp.pad(hidden[0], ((0, 0), (0, B_pad - B), (0, G - H)))
    c0 = jnp.pad(hidden[1], ((0, 0), (0, B_pad - B), (0, G - H)))

    kernel_inputs = [x_tm, h0, c0]
    for l in range(L):
        lp = kparams["layers"][l]
        kernel_inputs += [lp["wihT"], lp["whhT"], lp["b"]]
    kernel_inputs += [kparams["fcT"], kparams["fcb"]]

    vmem = pltpu.MemorySpace.VMEM
    out_shape = (
        jax.ShapeDtypeStruct((B_pad, OP), jnp.float32),           # sigmoid(fc(h_{T-1})), lane-padded
        jax.ShapeDtypeStruct((L, B_pad, G), jnp.float32),         # h_n (padded)
        jax.ShapeDtypeStruct((L, B_pad, G), jnp.float32),         # c_n (padded)
    )

    # TODO(synk): at realistic sizes (large T/B/H) stream x and the inter-layer sequence through a
    # T-chunk grid / double-buffered DMA ring, grid-parallelize the batch axis (megacore), and for
    # deep stacks interleave adjacent layers as a wavefront to hide MXU latency bubbles; at these
    # tiny shapes everything is fully VMEM-resident in a single program.
    sig_full, h_n_p, c_n_p = pl.pallas_call(
        make_lstm_kernel(L, B_pad, T, H, roll_shifts),
        out_shape=out_shape,
        in_specs=[pl.BlockSpec(memory_space=vmem)] * len(kernel_inputs),
        out_specs=(pl.BlockSpec(memory_space=vmem),) * 3,
        scratch_shapes=[pltpu.VMEM((T * B_pad, G), jnp.float32),   # hoisted input projection
                        pltpu.VMEM((T * B_pad, G), jnp.float32)],  # inter-layer sequence buffer
        compiler_params=pltpu.CompilerParams(vmem_limit_bytes=32 * 1024 * 1024),
    )(*kernel_inputs)

    sigmoid_out = sig_full[:B, O - 1]                     # view(B, -1)[:, -1] semantics
    h_n = h_n_p[:, :B, :H]
    c_n = c_n_p[:, :B, :H]
    return sigmoid_out, (h_n, c_n)


def reference_forward(x_tokens, hidden, params, *, n_layers, hidden_dim, output_size):
    """Pure-JAX reference of the PyTorch forward (eval mode)."""
    B, T = x_tokens.shape
    H = hidden_dim
    emb = jnp.take(params["embedding"], x_tokens, axis=0)         # (B, T, E)
    h0, c0 = hidden
    layer_in = emb
    h_n, c_n = [], []
    for l in range(n_layers):
        lp = params["layers"][l]
        w_ihT = jnp.transpose(lp["w_ih"])
        w_hhT = jnp.transpose(lp["w_hh"])
        b = lp["b_ih"] + lp["b_hh"]
        h, c = h0[l], c0[l]
        outs = []
        for t in range(T):
            g = layer_in[:, t, :] @ w_ihT + h @ w_hhT + b
            i_g = jax.nn.sigmoid(g[:, 0 * H:1 * H])
            f_g = jax.nn.sigmoid(g[:, 1 * H:2 * H])
            g_g = jnp.tanh(g[:, 2 * H:3 * H])
            o_g = jax.nn.sigmoid(g[:, 3 * H:4 * H])
            c = f_g * c + i_g * g_g
            h = o_g * jnp.tanh(c)
            outs.append(h)
        layer_in = jnp.stack(outs, axis=1)
        h_n.append(h)
        c_n.append(c)
    lstm_out = layer_in.reshape(-1, H)
    out = lstm_out @ jnp.transpose(params["fc_w"]) + params["fc_b"]
    sig = jax.nn.sigmoid(out).reshape(B, -1)
    return sig[:, -1], (jnp.stack(h_n), jnp.stack(c_n))


if __name__ == "__main__":
    VOCAB, OUTPUT, EMBED, HIDDEN, LAYERS = 100, 1, 32, 32, 2
    B, T = 2, 8

    key = jax.random.PRNGKey(0)
    k_tok, k_param = jax.random.split(key)
    params = init_params(k_param, VOCAB, OUTPUT, EMBED, HIDDEN, LAYERS)
    kparams = prepare_kernel_params(params, n_layers=LAYERS, hidden_dim=HIDDEN,
                                    output_size=OUTPUT)
    roll_shifts = _calibrate_roll_shifts(HIDDEN)          # one-time probe, not in the hot path

    x_tokens = jax.random.randint(k_tok, (B, T), 0, VOCAB, dtype=jnp.int32)
    hidden = (jnp.zeros((LAYERS, B, HIDDEN), jnp.float32),
              jnp.zeros((LAYERS, B, HIDDEN), jnp.float32))   # init_hidden(batch_size)

    sig_out, (h_n, c_n) = sentiment_forward(
        x_tokens, hidden, kparams,
        n_layers=LAYERS, hidden_dim=HIDDEN, output_size=OUTPUT, roll_shifts=roll_shifts)
    jax.block_until_ready((sig_out, h_n, c_n))

    ref_sig, (ref_h, ref_c) = reference_forward(
        x_tokens, hidden, params,
        n_layers=LAYERS, hidden_dim=HIDDEN, output_size=OUTPUT)

    assert jnp.allclose(sig_out, ref_sig, atol=1e-4, rtol=1e-4)
    assert jnp.allclose(h_n, ref_h, atol=1e-4, rtol=1e-4)
    assert jnp.allclose(c_n, ref_c, atol=1e-4, rtol=1e-4)
    print("KERNEL_OK")
</pallas_src>

<mosaic_0001>
module attributes {stable_mosaic.version = 11 : i64} {
  func.func @probe_kernel(%arg0: memref<8x128xf32, #tpu.memory_space<vmem>>, %arg1: memref<8x128xf32, #tpu.memory_space<vmem>>) attributes {dimension_semantics = [], scalar_prefetch = 0 : i64, scratch_operands = 0 : i64, tpu.core_type = #tpu.core_type<tc>} {
    %c0 = arith.constant 0 : index
    %c0_0 = arith.constant 0 : index
    %0 = vector.load %arg0[%c0, %c0_0] : memref<8x128xf32, #tpu.memory_space<vmem>>, vector<8x128xf32>
    %c32_i32 = arith.constant 32 : i32
    %1 = tpu.dynamic_rotate %0 by %c32_i32 dim 1 : vector<8x128xf32>, i32 -> vector<8x128xf32>
    %c0_1 = arith.constant 0 : index
    %c0_2 = arith.constant 0 : index
    %2 = vector.load %arg1[%c0_1, %c0_2] : memref<8x128xf32, #tpu.memory_space<vmem>>, vector<8x128xf32>
    tpu.vector_store %arg1[%c0_1, %c0_2], %1 {strides = array<i32>} : memref<8x128xf32, #tpu.memory_space<vmem>>, vector<8x128xf32>,
    return
  }
}

</mosaic_0001>

<llo_original>
// kernel: tpu_custom_call.1
$region0: #{tpu_custom_call.1}
  #allocation0 [shape = 'u32[]', space=smem, size = 0x4, offset = 0x4, fixed_abs, tag = 'smem constant byte address 0x4 - core index']
  #allocation1 [shape = 'u32[72,128]{1,0:T(1,128)}', space=vmem, size = 0x9000, scoped, tag = 'internal scratch']
  %s0 = inlined_call_operand.hbm [shape: f32[8,128], index: 0, kind: input, shape index: {}]
  %s1 = inlined_call_operand.hbm [shape: f32[8,128], index: 1, kind: output, shape index: {}]
  %s2 = sld [smem:[#allocation0]]
  $region18: #{tpu_custom_call.1} parent=0
    _
  %s4 = ssub.s32 1, %s2
  %s5 = scalar_select 0, %s4, %s2
  $region1: #{tpu_custom_call.1} parent=0
    #allocation2 [shape = 'u8[4096]{0}', space=vmem, size = 0x1000, scoped, tag = 'input window, operand 0, single buffered']
    #allocation3 [shape = 's32[1]{0}', space=sflag, size = 0x4, scoped, tag = 'scoped memory for tpu_custom_call.1']
    #allocation4 [shape = 's32[1]{0}', space=sflag, size = 0x4, scoped, tag = 'scoped memory for tpu_custom_call.1']
    #allocation5 [shape = 'u8[4096]{0}', space=vmem, size = 0x1000, scoped, tag = 'output window, operand 0, single buffered']
    %6 = vsyncpa [#allocation3], 0
    %7 = vsyncpa [#allocation4], 0
    // Predicated region
    $region2: #{tpu_custom_call.1} parent=1 // pred_check
      _
    $region3: #{tpu_custom_call.1} parent=1 // pred_check_branch
      %9 = sbr.rel (0) target = $region5
    $region4: #{tpu_custom_call.1} parent=1 // pred_region
      %11 = vsyncadd [#allocation3], 0
      %s13 = sshll.u32 %s0, 4
      %s14 = int_to_ptr.hbm [resolvable:$true] %s13
      %s15 = sshll.u32 [#allocation2], 4
      %s16 = int_to_ptr.vmem [resolvable:$true] %s15
      %18 = dma.hbm_to_vmem [thread:$0]  %s14, 128, %s16, [#allocation3]
    $region5: #{tpu_custom_call.1} parent=1 // pred_fallthru
      _
    // Predicated region
    $region6: #{tpu_custom_call.1} parent=1 // pred_check
      _
    $region7: #{tpu_custom_call.1} parent=1 // pred_check_branch
      %20 = sbr.rel (0) target = $region9
    $region8: #{tpu_custom_call.1} parent=1 // pred_region
      %22 = dma.done [#allocation3], 128
    $region9: #{tpu_custom_call.1} parent=1 // pred_fallthru
      _
    %v23 = vld [vmem:[#allocation2] sm:$0xff]
    %24 = vrot.lane.b32.xlu0 %v23, 32
    %v25 = vpop.permute.xlu0 %24
    %26 = vst [vmem:[#allocation5] sm:$0xff] %v25
    // Predicated region
    $region10: #{tpu_custom_call.1} parent=1 // pred_check
      _
    $region11: #{tpu_custom_call.1} parent=1 // pred_check_branch
      %28 = sbr.rel (0) target = $region13
    $region12: #{tpu_custom_call.1} parent=1 // pred_region
      %30 = vsyncadd [#allocation4], 0
      %s32 = sshll.u32 [#allocation5], 4
      %s33 = int_to_ptr.vmem [resolvable:$true] %s32
      %s34 = sshll.u32 %s1, 4
      %s35 = int_to_ptr.hbm [resolvable:$true] %s34
      %37 = dma.vmem_to_hbm [thread:$0]  %s33, 128, %s35, [#allocation4]
    $region13: #{tpu_custom_call.1} parent=1 // pred_fallthru
      _
    // Predicated region
    $region14: #{tpu_custom_call.1} parent=1 // pred_check
      _
    $region15: #{tpu_custom_call.1} parent=1 // pred_check_branch
      %39 = sbr.rel (0) target = $region17
    $region16: #{tpu_custom_call.1} parent=1 // pred_region
      %41 = dma.done [#allocation4], 128
    $region17: #{tpu_custom_call.1} parent=1 // pred_fallthru
      _
    %42 = vsyncpa [#allocation3], 1
    %43 = vsyncpa [#allocation4], 1

</llo_original>
